<compile_context>
chip_gen: v7x
topology: tpu7x:2x2x1
jax: 0.10.0
libtpu: 0.0.40
codegen_flags: <defaults>
</compile_context>

<pallas_src>
import jax
import jax.numpy as jnp
from jax.experimental import pallas as pl
from jax.experimental.pallas import tpu as pltpu

# ---------------- problem dimensions (small, per instructions) ----------------
B = 8        # batch
NX = 16      # state dim
NU = 16      # control dim
NH = 32      # hidden dim of policy MLP

UMAX = 0.5       # constraint bound on u
W_OBJ = 1.0      # objective weight
W_CON = 10.0     # constraint penalty weight

# compile-time reduction scales (mean == sum * inv_count)
INV_OBJ = 1.0 / float(B * NX)
INV_PEN = 1.0 / float(B * NU)

# ----------------- packed parameter slab layout (static, 8-row aligned) --------
ROW_W1 = 0     # (NX, NH)  rows [0, 16)   cols [0, 32)
ROW_W2 = 16    # (NH, NU)  rows [16, 48)  cols [0, 16)
ROW_A = 48     # (NX, NX)  rows [48, 64)  cols [0, 16)
ROW_BM = 64    # (NU, NX)  rows [64, 80)  cols [0, 16)
ROW_B1 = 80    # (1, NH)   row 80         cols [0, 32)
ROW_B2 = 88    # (1, NU)   row 88         cols [0, 16)
ROW_C = 96     # (1, NX)   row 96         cols [0, 16)
SLAB_ROWS = 104
SLAB_COLS = 32


def build_param_slab(p):
    """Pack the 7 parameter arrays into one f32 slab with static row offsets."""
    slab = jnp.zeros((SLAB_ROWS, SLAB_COLS), jnp.float32)
    slab = slab.at[ROW_W1:ROW_W1 + NX, 0:NH].set(p['W1'])
    slab = slab.at[ROW_W2:ROW_W2 + NH, 0:NU].set(p['W2'])
    slab = slab.at[ROW_A:ROW_A + NX, 0:NX].set(p['A'])
    slab = slab.at[ROW_BM:ROW_BM + NU, 0:NX].set(p['Bm'])
    slab = slab.at[ROW_B1:ROW_B1 + 1, 0:NH].set(p['b1'])
    slab = slab.at[ROW_B2:ROW_B2 + 1, 0:NU].set(p['b2'])
    slab = slab.at[ROW_C:ROW_C + 1, 0:NX].set(p['c'])
    return slab


# ------------------------------ fused Pallas kernel ----------------------------
def fused_problem_kernel(x_ref, xref_ref, p_ref, uxn_ref, scalars_ref):
    """One kernel body = node "policy" + node "dynamics" + PenaltyLoss.

    p_ref       : (104, 32) f32 packed parameter slab (static row offsets).
    uxn_ref     : (B, NU+NX) merged output [u | xnext].
    scalars_ref : (3,) f32 SMEM ref [objective, penalty, loss].
    """
    x = x_ref[...]                                                   # (B, NX)

    # node "policy": u = relu(x @ W1 + b1) @ W2 + b2
    h = jnp.dot(x, p_ref[ROW_W1:ROW_W1 + NX, 0:NH],
                preferred_element_type=jnp.float32)
    h = jnp.maximum(h + p_ref[ROW_B1:ROW_B1 + 1, 0:NH], 0.0)
    u = jnp.dot(h, p_ref[ROW_W2:ROW_W2 + NH, 0:NU],
                preferred_element_type=jnp.float32) + p_ref[ROW_B2:ROW_B2 + 1, 0:NU]

    # node "dynamics": xnext = x@A + u@Bm + c  (two independent dots; x@A does
    # not depend on u, so its MXU latency overlaps the policy path)
    xA = jnp.dot(x, p_ref[ROW_A:ROW_A + NX, 0:NX],
                 preferred_element_type=jnp.float32)
    uB = jnp.dot(u, p_ref[ROW_BM:ROW_BM + NU, 0:NX],
                 preferred_element_type=jnp.float32)
    xnext = xA + uB + p_ref[ROW_C:ROW_C + 1, 0:NX]

    # single wide store of the merged [u | xnext] slab (one writeback DMA)
    uxn_ref[...] = jnp.concatenate([u, xnext], axis=-1).astype(uxn_ref.dtype)

    # PenaltyLoss: sums scaled by compile-time constants, scalars to SMEM
    diff = xnext - xref_ref[...]
    obj = jnp.sum(diff * diff) * INV_OBJ
    viol = jnp.maximum(u - UMAX, 0.0)
    pen = jnp.sum(viol * viol) * INV_PEN
    scalars_ref[0] = obj
    scalars_ref[1] = pen
    scalars_ref[2] = W_OBJ * obj + W_CON * pen


def fused_problem_call(x, xref, pslab):
    vmem = pltpu.MemorySpace.VMEM
    # TODO(synk): for B >~ 256 add a batch grid (block (256, NX)) with
    # dimension_semantics=("parallel",) and pl.when-accumulated loss scalars;
    # at B=8 a grid is pure overhead.
    return pl.pallas_call(
        fused_problem_kernel,
        out_shape=(
            jax.ShapeDtypeStruct((x.shape[0], NU + NX), jnp.float32),  # [u | xnext]
            jax.ShapeDtypeStruct((3,), jnp.float32),                   # obj,pen,loss
        ),
        in_specs=[pl.BlockSpec(memory_space=vmem)] * 3,
        out_specs=(
            pl.BlockSpec(memory_space=vmem),
            pl.BlockSpec(memory_space=pltpu.MemorySpace.SMEM),
        ),
    )(x, xref, pslab)


@jax.jit
def _numeric_forward(x, xref, pslab):
    """pallas_call + output split + scalar indexing, all fused under one jit."""
    uxn, scalars = fused_problem_call(x, xref, pslab)
    u = uxn[:, :NU]
    xnext = uxn[:, NU:]
    return u, xnext, scalars[0], scalars[1], scalars[2]


# ----------------------- Problem.forward equivalent ----------------------------
class PallasProblem:
    """Mirrors neuromancer Problem.forward: run nodes, apply PenaltyLoss,
    prefix output keys with data['name'].  The two nodes + loss are fused into
    one Pallas kernel; the dict plumbing stays in Python (pure glue)."""

    def __init__(self, params):
        self.p = dict(params)
        # one-time parameter prep: pack everything into a single padded slab
        self.pslab = build_param_slab(params)

    def forward(self, data):
        x, xref = data['x'], data['xref']
        u, xnext, obj, pen, loss = _numeric_forward(x, xref, self.pslab)

        # equivalent of: step() dict-merge over nodes, then loss() dict-merge
        output_dict = {
            **data,
            'u': u,
            'xnext': xnext,
            'objective': obj,
            'penalty': pen,
            'loss': loss,
        }
        name = data['name']
        return {f"{name}_{k}": v for k, v in output_dict.items() if k != 'name'}


# --------------------------- reference (plain JAX) ------------------------------
def reference_forward(data, p):
    x, xref = data['x'], data['xref']
    h = jnp.maximum(x @ p['W1'] + p['b1'], 0.0)
    u = h @ p['W2'] + p['b2']
    xnext = x @ p['A'] + u @ p['Bm'] + p['c']
    obj = jnp.mean((xnext - xref) ** 2)
    pen = jnp.mean(jnp.maximum(u - UMAX, 0.0) ** 2)
    total = W_OBJ * obj + W_CON * pen
    name = data['name']
    return {f"{name}_x": x, f"{name}_xref": xref, f"{name}_u": u,
            f"{name}_xnext": xnext, f"{name}_objective": obj,
            f"{name}_penalty": pen, f"{name}_loss": total}


# ------------------------------------ main --------------------------------------
if __name__ == "__main__":
    key = jax.random.PRNGKey(0)
    kx, kref, k1, k2, k3, k4, k5 = jax.random.split(key, 7)

    # deterministic parameter init (shapes implied by the node definitions)
    params = {
        'W1': 0.1 * jax.random.normal(k1, (NX, NH), jnp.float32),
        'b1': jnp.zeros((1, NH), jnp.float32),
        'W2': 0.1 * jax.random.normal(k2, (NH, NU), jnp.float32),
        'b2': jnp.zeros((1, NU), jnp.float32),
        'A': 0.1 * jax.random.normal(k3, (NX, NX), jnp.float32),
        'Bm': 0.1 * jax.random.normal(k4, (NU, NX), jnp.float32),
        'c': 0.01 * jax.random.normal(k5, (1, NX), jnp.float32),
    }

    data = {
        'name': 'train',
        'x': jax.random.normal(kx, (B, NX), jnp.float32),
        'xref': jax.random.normal(kref, (B, NX), jnp.float32),
    }

    problem = PallasProblem(params)
    out = problem.forward(data)
    out = jax.tree_util.tree_map(jax.block_until_ready, out)

    ref = reference_forward(data, params)
    for k in ref:
        assert k in out, f"missing key {k}"
        assert jnp.allclose(out[k], ref[k], rtol=1e-5, atol=1e-5), f"mismatch for {k}"

    # TODO(synk): Problem.graph()/show() (pydot visualization) has no numerical
    # content and is not translated.
    print("KERNEL_OK")
</pallas_src>

<mosaic_0001>
module attributes {stable_mosaic.version = 11 : i64} {
  func.func @fused_problem_kernel(%arg0: memref<8x16xf32, #tpu.memory_space<vmem>>, %arg1: memref<8x16xf32, #tpu.memory_space<vmem>>, %arg2: memref<104x32xf32, #tpu.memory_space<vmem>>, %arg3: memref<8x32xf32, #tpu.memory_space<vmem>>, %arg4: memref<3xf32, #tpu.memory_space<smem>>) attributes {dimension_semantics = [], scalar_prefetch = 0 : i64, scratch_operands = 0 : i64, tpu.core_type = #tpu.core_type<tc>} {
    %c0 = arith.constant 0 : index
    %c0_0 = arith.constant 0 : index
    %0 = vector.load %arg0[%c0, %c0_0] : memref<8x16xf32, #tpu.memory_space<vmem>>, vector<8x16xf32>
    %c0_1 = arith.constant 0 : index
    %c0_2 = arith.constant 0 : index
    %1 = vector.load %arg2[%c0_1, %c0_2] : memref<104x32xf32, #tpu.memory_space<vmem>>, vector<16x32xf32>
    %cst = arith.constant dense<0.000000e+00> : vector<8x32xf32>
    %2 = tpu.matmul %0, %1, %cst {dimension_numbers = #tpu.dot_dimension_numbers<[1], [0], [0], [1], [0, 0, 1, 1], [], []>} : vector<8x16xf32>, vector<16x32xf32>, vector<8x32xf32> -> vector<8x32xf32>
    %c80 = arith.constant 80 : index
    %c0_3 = arith.constant 0 : index
    %3 = vector.load %arg2[%c80, %c0_3] : memref<104x32xf32, #tpu.memory_space<vmem>>, vector<1x32xf32>
    %4 = vector.broadcast %3 : vector<1x32xf32> to vector<8x32xf32>
    %5 = arith.addf %2, %4 : vector<8x32xf32>
    %cst_4 = arith.constant 0.000000e+00 : f32
    %6 = vector.broadcast %cst_4 : f32 to vector<8x32xf32>
    %7 = arith.maximumf %5, %6 : vector<8x32xf32>
    %c16 = arith.constant 16 : index
    %c0_5 = arith.constant 0 : index
    %8 = vector.load %arg2[%c16, %c0_5] : memref<104x32xf32, #tpu.memory_space<vmem>>, vector<32x16xf32>
    %cst_6 = arith.constant dense<0.000000e+00> : vector<8x16xf32>
    %9 = tpu.matmul %7, %8, %cst_6 {dimension_numbers = #tpu.dot_dimension_numbers<[1], [0], [0], [1], [0, 0, 1, 1], [], []>} : vector<8x32xf32>, vector<32x16xf32>, vector<8x16xf32> -> vector<8x16xf32>
    %c88 = arith.constant 88 : index
    %c0_7 = arith.constant 0 : index
    %10 = vector.load %arg2[%c88, %c0_7] : memref<104x32xf32, #tpu.memory_space<vmem>>, vector<1x16xf32>
    %11 = vector.broadcast %10 : vector<1x16xf32> to vector<8x16xf32>
    %12 = arith.addf %9, %11 : vector<8x16xf32>
    %c48 = arith.constant 48 : index
    %c0_8 = arith.constant 0 : index
    %13 = vector.load %arg2[%c48, %c0_8] : memref<104x32xf32, #tpu.memory_space<vmem>>, vector<16x16xf32>
    %cst_9 = arith.constant dense<0.000000e+00> : vector<8x16xf32>
    %14 = tpu.matmul %0, %13, %cst_9 {dimension_numbers = #tpu.dot_dimension_numbers<[1], [0], [0], [1], [0, 0, 1, 1], [], []>} : vector<8x16xf32>, vector<16x16xf32>, vector<8x16xf32> -> vector<8x16xf32>
    %c64 = arith.constant 64 : index
    %c0_10 = arith.constant 0 : index
    %15 = vector.load %arg2[%c64, %c0_10] : memref<104x32xf32, #tpu.memory_space<vmem>>, vector<16x16xf32>
    %cst_11 = arith.constant dense<0.000000e+00> : vector<8x16xf32>
    %16 = tpu.matmul %12, %15, %cst_11 {dimension_numbers = #tpu.dot_dimension_numbers<[1], [0], [0], [1], [0, 0, 1, 1], [], []>} : vector<8x16xf32>, vector<16x16xf32>, vector<8x16xf32> -> vector<8x16xf32>
    %17 = arith.addf %14, %16 : vector<8x16xf32>
    %c96 = arith.constant 96 : index
    %c0_12 = arith.constant 0 : index
    %18 = vector.load %arg2[%c96, %c0_12] : memref<104x32xf32, #tpu.memory_space<vmem>>, vector<1x16xf32>
    %19 = vector.broadcast %18 : vector<1x16xf32> to vector<8x16xf32>
    %20 = arith.addf %17, %19 : vector<8x16xf32>
    %21 = tpu.concatenate %12, %20 in 1 : vector<8x16xf32>, vector<8x16xf32> -> vector<8x32xf32>
    %c0_13 = arith.constant 0 : index
    %c0_14 = arith.constant 0 : index
    %22 = vector.load %arg3[%c0_13, %c0_14] : memref<8x32xf32, #tpu.memory_space<vmem>>, vector<8x32xf32>
    tpu.vector_store %arg3[%c0_13, %c0_14], %21 {strides = array<i32>} : memref<8x32xf32, #tpu.memory_space<vmem>>, vector<8x32xf32>,
    %c0_15 = arith.constant 0 : index
    %c0_16 = arith.constant 0 : index
    %23 = vector.load %arg1[%c0_15, %c0_16] : memref<8x16xf32, #tpu.memory_space<vmem>>, vector<8x16xf32>
    %24 = arith.subf %20, %23 : vector<8x16xf32>
    %25 = arith.mulf %24, %24 : vector<8x16xf32>
    %26 = vector.shape_cast %25 : vector<8x16xf32> to vector<1x8x16xf32>
    %cst_17 = arith.constant dense<0.000000e+00> : vector<1xf32>
    %27 = vector.multi_reduction <add>, %26, %cst_17 [1, 2] : vector<1x8x16xf32> to vector<1xf32>
    %28 = vector.shape_cast %27 : vector<1xf32> to vector<1x1x1xf32>
    %29 = vector.extract %28[0, 0, 0] : f32 from vector<1x1x1xf32>
    %cst_18 = arith.constant 7.812500e-03 : f32
    %30 = arith.mulf %29, %cst_18 : f32
    %cst_19 = arith.constant 5.000000e-01 : f32
    %31 = vector.broadcast %cst_19 : f32 to vector<8x16xf32>
    %32 = arith.subf %12, %31 : vector<8x16xf32>
    %cst_20 = arith.constant 0.000000e+00 : f32
    %33 = vector.broadcast %cst_20 : f32 to vector<8x16xf32>
    %34 = arith.maximumf %32, %33 : vector<8x16xf32>
    %35 = arith.mulf %34, %34 : vector<8x16xf32>
    %36 = vector.shape_cast %35 : vector<8x16xf32> to vector<1x8x16xf32>
    %cst_21 = arith.constant dense<0.000000e+00> : vector<1xf32>
    %37 = vector.multi_reduction <add>, %36, %cst_21 [1, 2] : vector<1x8x16xf32> to vector<1xf32>
    %38 = vector.shape_cast %37 : vector<1xf32> to vector<1x1x1xf32>
    %39 = vector.extract %38[0, 0, 0] : f32 from vector<1x1x1xf32>
    %cst_22 = arith.constant 7.812500e-03 : f32
    %40 = arith.mulf %39, %cst_22 : f32
    %c0_23 = arith.constant 0 : index
    %41 = memref.load %arg4[%c0_23] : memref<3xf32, #tpu.memory_space<smem>>
    memref.store %30, %arg4[%c0_23] : memref<3xf32, #tpu.memory_space<smem>>
    %c1 = arith.constant 1 : index
    %42 = memref.load %arg4[%c1] : memref<3xf32, #tpu.memory_space<smem>>
    memref.store %40, %arg4[%c1] : memref<3xf32, #tpu.memory_space<smem>>
    %cst_24 = arith.constant 1.000000e+00 : f32
    %43 = arith.mulf %cst_24, %30 : f32
    %cst_25 = arith.constant 1.000000e+01 : f32
    %44 = arith.mulf %cst_25, %40 : f32
    %45 = arith.addf %43, %44 : f32
    %c2 = arith.constant 2 : index
    %46 = memref.load %arg4[%c2] : memref<3xf32, #tpu.memory_space<smem>>
    memref.store %45, %arg4[%c2] : memref<3xf32, #tpu.memory_space<smem>>
    return
  }
}

</mosaic_0001>

<llo_original>
// kernel: _numeric_forward.1
$region0: #{_numeric_forward.1}
  #allocation0 [shape = 'u32[]', space=smem, size = 0x4, offset = 0x4, fixed_abs, tag = 'smem constant byte address 0x4 - core index']
  #allocation1 [shape = 'u32[144,128]{1,0:T(1,128)}', space=vmem, size = 0x12000, scoped, tag = 'internal scratch']
  %s0 = inlined_call_operand.vmem [shape: f32[8,16], index: 0, kind: input, shape index: {}]
  %s1 = inlined_call_operand.vmem [shape: f32[8,16], index: 1, kind: input, shape index: {}]
  %s2 = inlined_call_operand.vmem [shape: f32[104,32], index: 2, kind: input, shape index: {}]
  %s3 = inlined_call_operand.vmem [shape: f32[8,32], index: 3, kind: output, shape index: {0}]
  %s4 = inlined_call_operand.vmem [shape: f32[3], index: 4, kind: output, shape index: {1}]
  %5 = xla_tuple %s3, %s4
  %s6 = sld [smem:[#allocation0]]
  $region30: #{_numeric_forward.1} parent=0
    _
  %s8 = ssub.s32 1, %s6
  %s9 = scalar_select 0, %s8, %s6
  $region1: #{_numeric_forward.1} parent=0
    #allocation2 [shape = 'u8[512]{0}', space=smem, size = 0x200, scoped, tag = 'output window, operand 1, single buffered']
    #allocation3 [shape = 's32[1]{0}', space=sflag, size = 0x4, scoped, tag = 'scoped memory for _numeric_forward.1']
    %10 = vsyncpa [#allocation3], 0
    // Predicated region
    $region2: #{_numeric_forward.1} parent=1 // pred_check
      _
    $region3: #{_numeric_forward.1} parent=1 // pred_check_branch
      %12 = sbr.rel (0) target = $region5
    $region4: #{_numeric_forward.1} parent=1 // pred_region
      _
    $region5: #{_numeric_forward.1} parent=1 // pred_fallthru
      _
    // Predicated region
    $region6: #{_numeric_forward.1} parent=1 // pred_check
      _
    $region7: #{_numeric_forward.1} parent=1 // pred_check_branch
      %14 = sbr.rel (0) target = $region9
    $region8: #{_numeric_forward.1} parent=1 // pred_region
      _
    $region9: #{_numeric_forward.1} parent=1 // pred_fallthru
      _
    // Predicated region
    $region10: #{_numeric_forward.1} parent=1 // pred_check
      _
    $region11: #{_numeric_forward.1} parent=1 // pred_check_branch
      %16 = sbr.rel (0) target = $region13
    $region12: #{_numeric_forward.1} parent=1 // pred_region
      _
    $region13: #{_numeric_forward.1} parent=1 // pred_fallthru
      _
    %v17 = vld [vmem:[%s0] sm:$0xff]
    %v18 = vld [vmem:[%s2] sm:$0xff]
    %v19 = vld [vmem:[%s2 + $0x8] sm:$0xff]
    %v20 = vld [vmem:[%s2 + $0x50] sm:$0x1]
    %v21 = vlaneseq
    %v22 = vshrl.u32 %v21, 7
    %v23 = vsub.s32 0, %v22
    %v24 = vrot.slane %v20, %v23
    %vm25 = vcmask 130048
    %v27 = vsel %vm25, %v17, 0
    %29 = vmatprep.subr.mxu0 0.0
    %30 = vmatpush1.msra.mxu0 %v18
    %31 = vmatprep.subr.mxu0 0.0
    %32 = vmatpush1.msra.mxu0 %v19
    %33 = vmatprep.subr.mxu0 0.0
    %34 = vmatpush1.msra.mxu0 0.0
    %35 = vmatprep.subr.mxu0 0.0
    %36 = vmatpush1.msra.mxu0 0.0
    %37 = vmatprep.subr.mxu0 0.0
    %38 = vmatpush1.msra.mxu0 0.0
    %39 = vmatprep.subr.mxu0 0.0
    %40 = vmatpush1.msra.mxu0 0.0
    %41 = vmatprep.subr.mxu0 0.0
    %42 = vmatpush1.msra.mxu0 0.0
    %43 = vmatprep.subr.mxu0 0.0
    %44 = vmatpush1.msra.mxu0 0.0
    %45 = vmatprep.subr.mxu0 0.0
    %46 = vmatpush1.msra.mxu0 0.0
    %47 = vmatprep.subr.mxu0 0.0
    %48 = vmatpush1.msra.mxu0 0.0
    %49 = vmatprep.subr.mxu0 0.0
    %50 = vmatpush1.msra.mxu0 0.0
    %51 = vmatprep.subr.mxu0 0.0
    %52 = vmatpush1.msra.mxu0 0.0
    %53 = vmatprep.subr.mxu0 0.0
    %54 = vmatpush1.msra.mxu0 0.0
    %55 = vmatprep.subr.mxu0 0.0
    %56 = vmatpush1.msra.mxu0 0.0
    %57 = vmatprep.subr.mxu0 0.0
    %58 = vmatpush1.msra.mxu0 0.0
    %59 = vmatprep.subr.mxu0 0.0
    %60 = vmatpush1.msra.mxu0 0.0
    %61 = vmatprep.subr.mxu0 0.0
    %62 = vmatpush1.msra.mxu0 0.0
    %63 = vmatprep.subr.mxu0 0.0
    %64 = vmatpush1.msra.mxu0 0.0
    %65 = vmatprep.subr.mxu0 0.0
    %66 = vmatpush1.msra.mxu0 0.0
    %67 = vmatprep.subr.mxu0 0.0
    %68 = vmatpush1.msra.mxu0 0.0
    %69 = vmatprep.subr.mxu0 0.0
    %70 = vmatpush1.msra.mxu0 0.0
    %71 = vmatprep.subr.mxu0 0.0
    %72 = vmatpush1.msra.mxu0 0.0
    %73 = vmatprep.subr.mxu0 0.0
    %74 = vmatpush1.msra.mxu0 0.0
    %75 = vmatprep.subr.mxu0 0.0
    %76 = vmatpush1.msra.mxu0 0.0
    %77 = vmatprep.subr.mxu0 0.0
    %78 = vmatpush1.msra.mxu0 0.0
    %79 = vmatprep.subr.mxu0 0.0
    %80 = vmatpush1.msra.mxu0 0.0
    %81 = vmatprep.subr.mxu0 0.0
    %82 = vmatpush1.msra.mxu0 0.0
    %83 = vmatprep.subr.mxu0 0.0
    %84 = vmatpush1.msra.mxu0 0.0
    %85 = vmatprep.subr.mxu0 0.0
    %86 = vmatpush1.msra.mxu0 0.0
    %87 = vmatprep.subr.mxu0 0.0
    %88 = vmatpush1.msra.mxu0 0.0
    %89 = vmatprep.subr.mxu0 0.0
    %90 = vmatpush1.msra.mxu0 0.0
    %91 = vmatprep.subr.mxu0 0.0
    %92 = vmatpush1.msra.mxu0 0.0
    %93 = vmatprep.mubr.f32.mxu0 0.0
    %94 = vmatmul.mubr.f32.gmra.mrb[0].mxu0 %v27
    %v95 = vpop.f32.mrb[0].mxu0
    %v96 = vadd.f32 %v24, %v95
    %v97 = vpop.f32.mrb[0].mxu0
    %98 = vdwg.mxu0
    %v99 = vmax.f32 %v96, 0.0
    %v100 = vld [vmem:[%s2 + $0x10] sm:$0xff]
    %v101 = vld [vmem:[%s2 + $0x18] sm:$0xff]
    %v102 = vld [vmem:[%s2 + $0x20] sm:$0xff]
    %v103 = vld [vmem:[%s2 + $0x28] sm:$0xff]
    %v104 = vld [vmem:[%s2 + $0x58] sm:$0x1]
    %v105 = vlaneseq
    %v106 = vshrl.u32 %v105, 7
    %v107 = vsub.s32 0, %v106
    %v108 = vrot.slane %v104, %v107
    %vm109 = vcmask 261120
    %v111 = vsel %vm109, %v99, 0
    %113 = vmatprep.subr.mxu0 0.0
    %114 = vmatpush1.msra.mxu0 %v100
    %115 = vmatprep.subr.mxu0 0.0
    %116 = vmatpush1.msra.mxu0 %v101
    %117 = vmatprep.subr.mxu0 0.0
    %118 = vmatpush1.msra.mxu0 %v102
    %119 = vmatprep.subr.mxu0 0.0
    %120 = vmatpush1.msra.mxu0 %v103
    %121 = vmatprep.subr.mxu0 0.0
    %122 = vmatpush1.msra.mxu0 0.0
    %123 = vmatprep.subr.mxu0 0.0
    %124 = vmatpush1.msra.mxu0 0.0
    %125 = vmatprep.subr.mxu0 0.0
    %126 = vmatpush1.msra.mxu0 0.0
    %127 = vmatprep.subr.mxu0 0.0
    %128 = vmatpush1.msra.mxu0 0.0
    %129 = vmatprep.subr.mxu0 0.0
    %130 = vmatpush1.msra.mxu0 0.0
    %131 = vmatprep.subr.mxu0 0.0
    %132 = vmatpush1.msra.mxu0 0.0
    %133 = vmatprep.subr.mxu0 0.0
    %134 = vmatpush1.msra.mxu0 0.0
    %135 = vmatprep.subr.mxu0 0.0
    %136 = vmatpush1.msra.mxu0 0.0
    %137 = vmatprep.subr.mxu0 0.0
    %138 = vmatpush1.msra.mxu0 0.0
    %139 = vmatprep.subr.mxu0 0.0
    %140 = vmatpush1.msra.mxu0 0.0
    %141 = vmatprep.subr.mxu0 0.0
    %142 = vmatpush1.msra.mxu0 0.0
    %143 = vmatprep.subr.mxu0 0.0
    %144 = vmatpush1.msra.mxu0 0.0
    %145 = vmatprep.subr.mxu0 0.0
    %146 = vmatpush1.msra.mxu0 0.0
    %147 = vmatprep.subr.mxu0 0.0
    %148 = vmatpush1.msra.mxu0 0.0
    %149 = vmatprep.subr.mxu0 0.0
    %150 = vmatpush1.msra.mxu0 0.0
    %151 = vmatprep.subr.mxu0 0.0
    %152 = vmatpush1.msra.mxu0 0.0
    %153 = vmatprep.subr.mxu0 0.0
    %154 = vmatpush1.msra.mxu0 0.0
    %155 = vmatprep.subr.mxu0 0.0
    %156 = vmatpush1.msra.mxu0 0.0
    %157 = vmatprep.subr.mxu0 0.0
    %158 = vmatpush1.msra.mxu0 0.0
    %159 = vmatprep.subr.mxu0 0.0
    %160 = vmatpush1.msra.mxu0 0.0
    %161 = vmatprep.subr.mxu0 0.0
    %162 = vmatpush1.msra.mxu0 0.0
    %163 = vmatprep.subr.mxu0 0.0
    %164 = vmatpush1.msra.mxu0 0.0
    %165 = vmatprep.subr.mxu0 0.0
    %166 = vmatpush1.msra.mxu0 0.0
    %167 = vmatprep.subr.mxu0 0.0
    %168 = vmatpush1.msra.mxu0 0.0
    %169 = vmatprep.subr.mxu0 0.0
    %170 = vmatpush1.msra.mxu0 0.0
    %171 = vmatprep.subr.mxu0 0.0
    %172 = vmatpush1.msra.mxu0 0.0
    %173 = vmatprep.subr.mxu0 0.0
    %174 = vmatpush1.msra.mxu0 0.0
    %175 = vmatprep.subr.mxu0 0.0
    %176 = vmatpush1.msra.mxu0 0.0
    %177 = vmatprep.mubr.f32.mxu0 0.0
    %178 = vmatmul.mubr.f32.gmra.mrb[0].mxu0 %v111
    %v179 = vpop.f32.mrb[0].mxu0
    %v180 = vadd.f32 %v108, %v179
    %v181 = vpop.f32.mrb[0].mxu0
    %182 = vdwg.mxu0
    %v183 = vld [vmem:[%s2 + $0x30] sm:$0xff]
    %v184 = vld [vmem:[%s2 + $0x38] sm:$0xff]
    %v185 = vld [vmem:[%s2 + $0x40] sm:$0xff]
    %v186 = vld [vmem:[%s2 + $0x48] sm:$0xff]
    %v188 = vsel %vm25, %v180, 0
    %190 = vmatprep.subr.mxu0 0.0
    %191 = vmatpush1.msra.mxu0 %v185
    %192 = vmatprep.subr.mxu0 0.0
    %193 = vmatpush1.msra.mxu0 %v186
    %194 = vmatprep.subr.mxu0 0.0
    %195 = vmatpush1.msra.mxu0 0.0
    %196 = vmatprep.subr.mxu0 0.0
    %197 = vmatpush1.msra.mxu0 0.0
    %198 = vmatprep.subr.mxu0 0.0
    %199 = vmatpush1.msra.mxu0 0.0
    %200 = vmatprep.subr.mxu0 0.0
    %201 = vmatpush1.msra.mxu0 0.0
    %202 = vmatprep.subr.mxu0 0.0
    %203 = vmatpush1.msra.mxu0 0.0
    %204 = vmatprep.subr.mxu0 0.0
    %205 = vmatpush1.msra.mxu0 0.0
    %206 = vmatprep.subr.mxu0 0.0
    %207 = vmatpush1.msra.mxu0 0.0
    %208 = vmatprep.subr.mxu0 0.0
    %209 = vmatpush1.msra.mxu0 0.0
    %210 = vmatprep.subr.mxu0 0.0
    %211 = vmatpush1.msra.mxu0 0.0
    %212 = vmatprep.subr.mxu0 0.0
    %213 = vmatpush1.msra.mxu0 0.0
    %214 = vmatprep.subr.mxu0 0.0
    %215 = vmatpush1.msra.mxu0 0.0
    %216 = vmatprep.subr.mxu0 0.0
    %217 = vmatpush1.msra.mxu0 0.0
    %218 = vmatprep.subr.mxu0 0.0
    %219 = vmatpush1.msra.mxu0 0.0
    %220 = vmatprep.subr.mxu0 0.0
    %221 = vmatpush1.msra.mxu0 0.0
    %222 = vmatprep.subr.mxu0 0.0
    %223 = vmatpush1.msra.mxu0 0.0
    %224 = vmatprep.subr.mxu0 0.0
    %225 = vmatpush1.msra.mxu0 0.0
    %226 = vmatprep.subr.mxu0 0.0
    %227 = vmatpush1.msra.mxu0 0.0
    %228 = vmatprep.subr.mxu0 0.0
    %229 = vmatpush1.msra.mxu0 0.0
    %230 = vmatprep.subr.mxu0 0.0
    %231 = vmatpush1.msra.mxu0 0.0
    %232 = vmatprep.subr.mxu0 0.0
    %233 = vmatpush1.msra.mxu0 0.0
    %234 = vmatprep.subr.mxu0 0.0
    %235 = vmatpush1.msra.mxu0 0.0
    %236 = vmatprep.subr.mxu0 0.0
    %237 = vmatpush1.msra.mxu0 0.0
    %238 = vmatprep.subr.mxu0 0.0
    %239 = vmatpush1.msra.mxu0 0.0
    %240 = vmatprep.subr.mxu0 0.0
    %241 = vmatpush1.msra.mxu0 0.0
    %242 = vmatprep.subr.mxu0 0.0
    %243 = vmatpush1.msra.mxu0 0.0
    %244 = vmatprep.subr.mxu0 0.0
    %245 = vmatpush1.msra.mxu0 0.0
    %246 = vmatprep.subr.mxu0 0.0
    %247 = vmatpush1.msra.mxu0 0.0
    %248 = vmatprep.subr.mxu0 0.0
    %249 = vmatpush1.msra.mxu0 0.0
    %250 = vmatprep.subr.mxu0 0.0
    %251 = vmatpush1.msra.mxu0 0.0
    %252 = vmatprep.subr.mxu0 0.0
    %253 = vmatpush1.msra.mxu0 0.0
    %254 = vmatprep.mubr.f32.mxu0 0.0
    %255 = vmatmul.mubr.f32.gmra.mrb[0].mxu0 %v188
    %v256 = vpop.f32.mrb[0].mxu0
    %v257 = vadd.f32 0.0, %v256
    %v258 = vpop.f32.mrb[0].mxu0
    %259 = vdwg.mxu0
    %260 = vmatprep.subr.mxu0 0.0
    %261 = vmatpush1.msra.mxu0 %v183
    %262 = vmatprep.subr.mxu0 0.0
    %263 = vmatpush1.msra.mxu0 %v184
    %264 = vmatprep.subr.mxu0 0.0
    %265 = vmatpush1.msra.mxu0 0.0
    %266 = vmatprep.subr.mxu0 0.0
    %267 = vmatpush1.msra.mxu0 0.0
    %268 = vmatprep.subr.mxu0 0.0
    %269 = vmatpush1.msra.mxu0 0.0
    %270 = vmatprep.subr.mxu0 0.0
    %271 = vmatpush1.msra.mxu0 0.0
    %272 = vmatprep.subr.mxu0 0.0
    %273 = vmatpush1.msra.mxu0 0.0
    %274 = vmatprep.subr.mxu0 0.0
    %275 = vmatpush1.msra.mxu0 0.0
    %276 = vmatprep.subr.mxu0 0.0
    %277 = vmatpush1.msra.mxu0 0.0
    %278 = vmatprep.subr.mxu0 0.0
    %279 = vmatpush1.msra.mxu0 0.0
    %280 = vmatprep.subr.mxu0 0.0
    %281 = vmatpush1.msra.mxu0 0.0
    %282 = vmatprep.subr.mxu0 0.0
    %283 = vmatpush1.msra.mxu0 0.0
    %284 = vmatprep.subr.mxu0 0.0
    %285 = vmatpush1.msra.mxu0 0.0
    %286 = vmatprep.subr.mxu0 0.0
    %287 = vmatpush1.msra.mxu0 0.0
    %288 = vmatprep.subr.mxu0 0.0
    %289 = vmatpush1.msra.mxu0 0.0
    %290 = vmatprep.subr.mxu0 0.0
    %291 = vmatpush1.msra.mxu0 0.0
    %292 = vmatprep.subr.mxu0 0.0
    %293 = vmatpush1.msra.mxu0 0.0
    %294 = vmatprep.subr.mxu0 0.0
    %295 = vmatpush1.msra.mxu0 0.0
    %296 = vmatprep.subr.mxu0 0.0
    %297 = vmatpush1.msra.mxu0 0.0
    %298 = vmatprep.subr.mxu0 0.0
    %299 = vmatpush1.msra.mxu0 0.0
    %300 = vmatprep.subr.mxu0 0.0
    %301 = vmatpush1.msra.mxu0 0.0
    %302 = vmatprep.subr.mxu0 0.0
    %303 = vmatpush1.msra.mxu0 0.0
    %304 = vmatprep.subr.mxu0 0.0
    %305 = vmatpush1.msra.mxu0 0.0
    %306 = vmatprep.subr.mxu0 0.0
    %307 = vmatpush1.msra.mxu0 0.0
    %308 = vmatprep.subr.mxu0 0.0
    %309 = vmatpush1.msra.mxu0 0.0
    %310 = vmatprep.subr.mxu0 0.0
    %311 = vmatpush1.msra.mxu0 0.0
    %312 = vmatprep.subr.mxu0 0.0
    %313 = vmatpush1.msra.mxu0 0.0
    %314 = vmatprep.subr.mxu0 0.0
    %315 = vmatpush1.msra.mxu0 0.0
    %316 = vmatprep.subr.mxu0 0.0
    %317 = vmatpush1.msra.mxu0 0.0
    %318 = vmatprep.subr.mxu0 0.0
    %319 = vmatpush1.msra.mxu0 0.0
    %320 = vmatprep.subr.mxu0 0.0
    %321 = vmatpush1.msra.mxu0 0.0
    %322 = vmatprep.subr.mxu0 0.0
    %323 = vmatpush1.msra.mxu0 0.0
    %324 = vmatprep.mubr.f32.mxu0 0.0
    %325 = vmatmul.mubr.f32.gmra.mrb[0].mxu0 %v27
    %v326 = vpop.f32.mrb[0].mxu0
    %v327 = vadd.f32 %v257, %v326
    %v328 = vpop.f32.mrb[0].mxu0
    %329 = vdwg.mxu0
    %v330 = vld [vmem:[%s2 + $0x60] sm:$0x1]
    %v331 = vlaneseq
    %v332 = vshrl.u32 %v331, 7
    %v333 = vsub.s32 0, %v332
    %v334 = vrot.slane %v330, %v333
    %v335 = vadd.f32 %v327, %v334
    %337 = vrot.lane.b32.xlu0 %v335, 16
    %v338 = vpop.permute.xlu0 %337
    %v340 = vsel %vm25, %v180, %v338
    %341 = vst.msk [vmem:[%s3] sm:$0xff] %vm109, %v340
    %v342 = vld [vmem:[%s1] sm:$0xff]
    %v343 = vsub.f32 %v335, %v342
    %v344 = vmul.f32 %v343, %v343
    %v345 = vsel %vm25, %v344, 0.0
    %346 = vadd.xlane.f32.xlu0 %v345
    %v347 = vpop.xlane.xlu0 %346
    %v348 = vrot.slane %v347, 4
    %v349 = vadd.f32 %v347, %v348
    %v350 = vrot.slane %v349, 2
    %v351 = vadd.f32 %v349, %v350
    %v352 = vrot.slane %v351, 1
    %v353 = vadd.f32 %v351, %v352
    %s354 = vtos %v353
    %s355 = smul.f32 %s354, 0.0078125
    %v356 = vsub.f32 %v180, 0.5
    %v357 = vmax.f32 %v356, 0.0
    %v358 = vmul.f32 %v357, %v357
    %v359 = vsel %vm25, %v358, 0.0
    %360 = vadd.xlane.f32.xlu0 %v359
    %v361 = vpop.xlane.xlu0 %360
    %v362 = vrot.slane %v361, 4
    %v363 = vadd.f32 %v361, %v362
    %v364 = vrot.slane %v363, 2
    %v365 = vadd.f32 %v363, %v364
    %v366 = vrot.slane %v365, 1
    %v367 = vadd.f32 %v365, %v366
    %s368 = vtos %v367
    %s369 = smul.f32 %s368, 0.0078125
    %s370 = scalar_lea.smem [#allocation2], 0
    %371 = sst [smem:[%s370]] %s355
    %s372 = scalar_lea.smem [#allocation2], 1
    %373 = sst [smem:[%s372]] %s369
    %s374 = smul.f32 %s369, 10.0
    %s375 = sadd.f32 %s355, %s374
    %s376 = scalar_lea.smem [#allocation2], 2
    %377 = sst [smem:[%s376]] %s375
    // Predicated region
    $region14: #{_numeric_forward.1} parent=1 // pred_check
      _
    $region15: #{_numeric_forward.1} parent=1 // pred_check_branch
      %379 = sbr.rel (0) target = $region17
    $region16: #{_numeric_forward.1} parent=1 // pred_region
      _
    $region17: #{_numeric_forward.1} parent=1 // pred_fallthru
      _
    // Predicated region
    $region18: #{_numeric_forward.1} parent=1 // pred_check
      _
    $region19: #{_numeric_forward.1} parent=1 // pred_check_branch
      %381 = sbr.rel (0) target = $region21
    $region20: #{_numeric_forward.1} parent=1 // pred_region
      %s383 = ssub.s32 16, 16
      %384 = vsyncadd [#allocation3], %s383
      %s386 = sshll.u32 %s4, 4
      %s387 = int_to_ptr.vmem [resolvable:$true] %s386
      %389 = dma.smem_to_vmem [#allocation2], 16, %s387, [#allocation3]
    $region21: #{_numeric_forward.1} parent=1 // pred_fallthru
      _
    // Predicated region
    $region22: #{_numeric_forward.1} parent=1 // pred_check
      _
    $region23: #{_numeric_forward.1} parent=1 // pred_check_branch
      %391 = sbr.rel (0) target = $region25
    $region24: #{_numeric_forward.1} parent=1 // pred_region
      _
    $region25: #{_numeric_forward.1} parent=1 // pred_fallthru
      _
    // Predicated region
    $region26: #{_numeric_forward.1} parent=1 // pred_check
      _
    $region27: #{_numeric_forward.1} parent=1 // pred_check_branch
      %393 = sbr.rel (0) target = $region29
    $region28: #{_numeric_forward.1} parent=1 // pred_region
      %394 = dma.done [#allocation3], 16
    $region29: #{_numeric_forward.1} parent=1 // pred_fallthru
      _
    %395 = sfence
    %396 = vsyncpa [#allocation3], 1

</llo_original>
